<compile_context>
chip_gen: v7x
topology: tpu7x:2x2x1
jax: 0.10.0
libtpu: 0.0.40
codegen_flags: <defaults>
</compile_context>

<pallas_src>
import jax
import jax.numpy as jnp
from jax.experimental import pallas as pl
from jax.experimental.pallas import tpu as pltpu


_ROW_BLOCK_MAX = 512       # rows per tile (sublane axis), multiple of 8
_D_BLOCK_MAX = 2048        # feature chunk per tile (lane axis), multiple of 128
_VMEM_LIMIT = 28 * 1024 * 1024


def _round_up(x, m):
    return (x + m - 1) // m * m


def _sq_err_kernel(s_ref, t_ref, o_ref):
    """Accumulate per-row sum of squared differences across D-chunks."""
    k = pl.program_id(1)          # reduction axis over feature chunks

    @pl.when(k == 0)
    def _():
        o_ref[...] = jnp.zeros_like(o_ref)

    s = s_ref[...].astype(jnp.float32)
    t = t_ref[...].astype(jnp.float32)
    d = s - t
    # raw sum of squares per row; division by the true D happens in the wrapper
    o_ref[...] += jnp.sum(d * d, axis=-1, keepdims=True)


def feature_loss(s_value, f_target, weight):
    """
    s_value, f_target : (num_stu, num_tea, bsz, C, H, W)  (stacked list-of-lists)
    weight            : (bsz, num_stu, num_tea)
    returns scalar loss (float32)
    """
    num_stu, num_tea, bsz = s_value.shape[:3]
    D = 1
    for d in s_value.shape[3:]:
        D *= int(d)
    R = num_stu * num_tea * bsz

    s2 = s_value.reshape(R, D)
    t2 = f_target.reshape(R, D)

    # ---- tiling choices (row_block multiple of 8, d_block multiple of 128) ----
    row_block = min(_round_up(R, 8), _ROW_BLOCK_MAX)
    d_block = min(_round_up(D, 128), _D_BLOCK_MAX)
    R_pad = _round_up(R, row_block)
    D_pad = _round_up(D, d_block)

    # Zero-padding both inputs is exact: padded diffs are 0, contribute nothing.
    if D_pad != D:
        s2 = jnp.pad(s2, ((0, 0), (0, D_pad - D)))
        t2 = jnp.pad(t2, ((0, 0), (0, D_pad - D)))
    if R_pad != R:
        s2 = jnp.pad(s2, ((0, R_pad - R), (0, 0)))
        t2 = jnp.pad(t2, ((0, R_pad - R), (0, 0)))

    grid = (R_pad // row_block, D_pad // d_block)

    sq = pl.pallas_call(
        _sq_err_kernel,
        out_shape=jax.ShapeDtypeStruct((R_pad, 1), jnp.float32),
        grid_spec=pltpu.PrefetchScalarGridSpec(
            num_scalar_prefetch=0,
            grid=grid,
            in_specs=[
                pl.BlockSpec((row_block, d_block), lambda r, k: (r, k)),
                pl.BlockSpec((row_block, d_block), lambda r, k: (r, k)),
            ],
            # same block across the D axis -> resident per-row accumulator
            out_specs=pl.BlockSpec((row_block, 1), lambda r, k: (r, 0)),
        ),
        compiler_params=pltpu.CompilerParams(
            dimension_semantics=("parallel", "arbitrary"),
            vmem_limit_bytes=_VMEM_LIMIT,
        ),
    )(s2, t2)

    # Tiny finalize in JAX: per-sample mean (/D), weighting, and the 0.1 scale.
    ind = sq[:R, 0].reshape(num_stu, num_tea, bsz) / jnp.float32(D)
    ind = jnp.transpose(ind, (2, 0, 1))                   # (bsz, num_stu, num_tea)
    return jnp.sum(weight.astype(jnp.float32) * ind) * jnp.float32(0.1)


def feature_loss_ref(s_value, f_target, weight):
    """Pure-JAX reference matching the PyTorch module."""
    num_stu, num_tea, bsz = s_value.shape[:3]
    s = s_value.reshape(num_stu, num_tea, bsz, -1).astype(jnp.float32)
    t = f_target.reshape(num_stu, num_tea, bsz, -1).astype(jnp.float32)
    ind = jnp.mean((s - t) ** 2, axis=-1)                 # (num_stu, num_tea, bsz)
    ind = jnp.transpose(ind, (2, 0, 1))                   # (bsz, num_stu, num_tea)
    return jnp.sum(weight.astype(jnp.float32) * ind) * 0.1


if __name__ == "__main__":
    key = jax.random.PRNGKey(0)
    k1, k2, k3 = jax.random.split(key, 3)

    bsz, num_stu, num_tea = 2, 3, 3
    C, H, W = 4, 8, 8   # D = 256

    s_value = jax.random.normal(k1, (num_stu, num_tea, bsz, C, H, W), jnp.float32)
    f_target = jax.random.normal(k2, (num_stu, num_tea, bsz, C, H, W), jnp.float32)
    weight = jax.nn.softmax(
        jax.random.normal(k3, (bsz, num_stu, num_tea), jnp.float32), axis=-1)

    loss = jax.block_until_ready(feature_loss(s_value, f_target, weight))
    ref = jax.block_until_ready(feature_loss_ref(s_value, f_target, weight))

    assert jnp.allclose(loss, ref, rtol=1e-5, atol=1e-5), (loss, ref)
    print("KERNEL_OK")
</pallas_src>

<mosaic_0001>
module attributes {stable_mosaic.version = 11 : i64} {
  func.func @_sq_err_kernel(%arg0: i32, %arg1: i32, %arg2: memref<24x256xf32, #tpu.memory_space<vmem>>, %arg3: memref<24x256xf32, #tpu.memory_space<vmem>>, %arg4: memref<24x1xf32, #tpu.memory_space<vmem>>) attributes {dimension_semantics = [#tpu.dimension_semantics<parallel>, #tpu.dimension_semantics<arbitrary>], iteration_bounds = array<i64: 1, 1>, scalar_prefetch = 0 : i64, scratch_operands = 0 : i64, tpu.core_type = #tpu.core_type<tc>, window_params = [{transform_indices = @transform_0, window_bounds = array<i64: 24, 256>}, {transform_indices = @transform_1, window_bounds = array<i64: 24, 256>}, {transform_indices = @transform_2, window_bounds = array<i64: 24, 1>}]} {
    %c0_i32 = arith.constant 0 : i32
    %0 = arith.cmpi eq, %arg1, %c0_i32 : i32
    %1 = arith.extui %0 : i1 to i32
    %c0_i32_0 = arith.constant 0 : i32
    %2 = arith.cmpi ne, %1, %c0_i32_0 : i32
    scf.if %2 {
      %cst_8 = arith.constant 0.000000e+00 : f32
      %12 = vector.broadcast %cst_8 : f32 to vector<24x1xf32>
      %c0_9 = arith.constant 0 : index
      %c0_10 = arith.constant 0 : index
      %13 = vector.load %arg4[%c0_9, %c0_10] : memref<24x1xf32, #tpu.memory_space<vmem>>, vector<24x1xf32>
      tpu.vector_store %arg4[%c0_9, %c0_10], %12 {strides = array<i32>} : memref<24x1xf32, #tpu.memory_space<vmem>>, vector<24x1xf32>,
    } else {
    }
    %c0 = arith.constant 0 : index
    %c0_1 = arith.constant 0 : index
    %3 = vector.load %arg2[%c0, %c0_1] : memref<24x256xf32, #tpu.memory_space<vmem>>, vector<24x256xf32>
    %c0_2 = arith.constant 0 : index
    %c0_3 = arith.constant 0 : index
    %4 = vector.load %arg3[%c0_2, %c0_3] : memref<24x256xf32, #tpu.memory_space<vmem>>, vector<24x256xf32>
    %5 = arith.subf %3, %4 : vector<24x256xf32>
    %c0_4 = arith.constant 0 : index
    %c0_5 = arith.constant 0 : index
    %6 = vector.load %arg4[%c0_4, %c0_5] : memref<24x1xf32, #tpu.memory_space<vmem>>, vector<24x1xf32>
    %7 = arith.mulf %5, %5 : vector<24x256xf32>
    %cst = arith.constant dense<0.000000e+00> : vector<24xf32>
    %8 = vector.multi_reduction <add>, %7, %cst [1] : vector<24x256xf32> to vector<24xf32>
    %9 = vector.shape_cast %8 : vector<24xf32> to vector<24x1xf32>
    %10 = arith.addf %6, %9 : vector<24x1xf32>
    %c0_6 = arith.constant 0 : index
    %c0_7 = arith.constant 0 : index
    %11 = vector.load %arg4[%c0_6, %c0_7] : memref<24x1xf32, #tpu.memory_space<vmem>>, vector<24x1xf32>
    tpu.vector_store %arg4[%c0_6, %c0_7], %10 {strides = array<i32>} : memref<24x1xf32, #tpu.memory_space<vmem>>, vector<24x1xf32>,
    return
  }
  func.func @transform_0(%arg0: i32, %arg1: i32) -> (i32, i32) {
    %c0_i32 = arith.constant 0 : i32
    return %arg0, %arg1 : i32, i32
  }
  func.func @transform_1(%arg0: i32, %arg1: i32) -> (i32, i32) {
    %c0_i32 = arith.constant 0 : i32
    return %arg0, %arg1 : i32, i32
  }
  func.func @transform_2(%arg0: i32, %arg1: i32) -> (i32, i32) {
    %c0_i32 = arith.constant 0 : i32
    %c0_i32_0 = arith.constant 0 : i32
    return %arg0, %c0_i32 : i32, i32
  }
}

</mosaic_0001>

<llo_original>
// kernel: tpu_custom_call.1
$region0: #{tpu_custom_call.1}
  #allocation0 [shape = 'u32[]', space=smem, size = 0x4, offset = 0x4, fixed_abs, tag = 'smem constant byte address 0x4 - core index']
  #allocation1 [shape = 'u32[144,128]{1,0:T(1,128)}', space=vmem, size = 0x12000, scoped, tag = 'internal scratch']
  %s0 = inlined_call_operand.hbm [shape: f32[24,256], index: 0, kind: input, shape index: {}]
  %s1 = inlined_call_operand.hbm [shape: f32[24,256], index: 1, kind: input, shape index: {}]
  %s2 = inlined_call_operand.vmem [shape: f32[24,1], index: 2, kind: output, shape index: {}]
  %s3 = sld [smem:[#allocation0]]
  $region30: #{tpu_custom_call.1} parent=0
    _
  %s5 = ssub.s32 1, %s3
  %s6 = scalar_select 0, %s5, %s3
  $region1: #{tpu_custom_call.1} parent=0
    #allocation2 [shape = 'u8[24576]{0}', space=vmem, size = 0x6000, scoped, tag = 'input window, operand 0, single buffered']
    #allocation3 [shape = 's32[1]{0}', space=sflag, size = 0x4, scoped, tag = 'scoped memory for tpu_custom_call.1']
    #allocation4 [shape = 'u8[24576]{0}', space=vmem, size = 0x6000, scoped, tag = 'input window, operand 1, single buffered']
    #allocation5 [shape = 's32[1]{0}', space=sflag, size = 0x4, scoped, tag = 'scoped memory for tpu_custom_call.1']
    %7 = vsyncpa [#allocation3], 0
    %8 = vsyncpa [#allocation5], 0
    // Predicated region
    $region2: #{tpu_custom_call.1} parent=1 // pred_check
      _
    $region3: #{tpu_custom_call.1} parent=1 // pred_check_branch
      %10 = sbr.rel (0) target = $region5
    $region4: #{tpu_custom_call.1} parent=1 // pred_region
      %s12 = ssub.s32 768, 768
      %13 = vsyncadd [#allocation3], %s12
      %s14 = sshll.u32 [#allocation2], 4
      %s15 = int_to_ptr.vmem [resolvable:$true] %s14
      %20 = dma.hbm_to_vmem [thread:$0]  %s0, 768, %s15, [#allocation3], 256, 256, 16
    $region5: #{tpu_custom_call.1} parent=1 // pred_fallthru
      _
    // Predicated region
    $region6: #{tpu_custom_call.1} parent=1 // pred_check
      _
    $region7: #{tpu_custom_call.1} parent=1 // pred_check_branch
      %22 = sbr.rel (0) target = $region9
    $region8: #{tpu_custom_call.1} parent=1 // pred_region
      %s24 = ssub.s32 768, 768
      %25 = vsyncadd [#allocation5], %s24
      %s26 = sshll.u32 [#allocation4], 4
      %s27 = int_to_ptr.vmem [resolvable:$true] %s26
      %32 = dma.hbm_to_vmem [thread:$0]  %s1, 768, %s27, [#allocation5], 256, 256, 16
    $region9: #{tpu_custom_call.1} parent=1 // pred_fallthru
      _
    // Predicated region
    $region10: #{tpu_custom_call.1} parent=1 // pred_check
      _
    $region11: #{tpu_custom_call.1} parent=1 // pred_check_branch
      %34 = sbr.rel (0) target = $region13
    $region12: #{tpu_custom_call.1} parent=1 // pred_region
      %35 = dma.done [#allocation3], 768
    $region13: #{tpu_custom_call.1} parent=1 // pred_fallthru
      _
    // Predicated region
    $region14: #{tpu_custom_call.1} parent=1 // pred_check
      _
    $region15: #{tpu_custom_call.1} parent=1 // pred_check_branch
      %37 = sbr.rel (0) target = $region17
    $region16: #{tpu_custom_call.1} parent=1 // pred_region
      %38 = dma.done [#allocation5], 768
    $region17: #{tpu_custom_call.1} parent=1 // pred_fallthru
      _
    %p39 = scmp.eq.s32.totalorder 0, 0
    // Predicated region
    $region18: #{tpu_custom_call.1} parent=1 // pred_check
      %p40 = pneg %p39
    $region19: #{tpu_custom_call.1} parent=1 // pred_check_branch
      %42 = sbr.rel (%p40) target = $region21
    $region20: #{tpu_custom_call.1} parent=1 // pred_region
      %vm43 = vcmask 7168
      %44 = vst.msk [vmem:[%s2] sm:$0xff] %vm43, 0.0
      %45 = vst.msk [vmem:[%s2 + $0x8] sm:$0xff] %vm43, 0.0
      %46 = vst.msk [vmem:[%s2 + $0x10] sm:$0xff] %vm43, 0.0
    $region21: #{tpu_custom_call.1} parent=1 // pred_fallthru
      _
    %v47 = vld [vmem:[#allocation2] sm:$0xff]
    %v48 = vld [vmem:[#allocation2 + $0x8] sm:$0xff]
    %v49 = vld [vmem:[#allocation2 + $0x10] sm:$0xff]
    %v50 = vld [vmem:[#allocation2 + $0x18] sm:$0xff]
    %v51 = vld [vmem:[#allocation2 + $0x20] sm:$0xff]
    %v52 = vld [vmem:[#allocation2 + $0x28] sm:$0xff]
    %v53 = vld [vmem:[#allocation4] sm:$0xff]
    %v54 = vld [vmem:[#allocation4 + $0x8] sm:$0xff]
    %v55 = vld [vmem:[#allocation4 + $0x10] sm:$0xff]
    %v56 = vld [vmem:[#allocation4 + $0x18] sm:$0xff]
    %v57 = vld [vmem:[#allocation4 + $0x20] sm:$0xff]
    %v58 = vld [vmem:[#allocation4 + $0x28] sm:$0xff]
    %v59 = vsub.f32 %v47, %v53
    %v60 = vsub.f32 %v48, %v54
    %v61 = vsub.f32 %v49, %v55
    %v62 = vsub.f32 %v50, %v56
    %v63 = vsub.f32 %v51, %v57
    %v64 = vsub.f32 %v52, %v58
    %v65 = vld [vmem:[%s2] sm:$0xff]
    %v66 = vld [vmem:[%s2 + $0x8] sm:$0xff]
    %v67 = vld [vmem:[%s2 + $0x10] sm:$0xff]
    %v68 = vmul.f32 %v59, %v59
    %v69 = vmul.f32 %v60, %v60
    %v70 = vmul.f32 %v61, %v61
    %v71 = vmul.f32 %v62, %v62
    %v72 = vmul.f32 %v63, %v63
    %v73 = vmul.f32 %v64, %v64
    %v74 = vadd.f32 %v68, %v69
    %75 = vadd.xlane.f32.xlu0 %v74
    %v76 = vpop.xlane.xlu0 %75
    %v77 = vadd.f32 %v70, %v71
    %78 = vadd.xlane.f32.xlu0 %v77
    %v79 = vpop.xlane.xlu0 %78
    %v80 = vadd.f32 %v72, %v73
    %81 = vadd.xlane.f32.xlu0 %v80
    %v82 = vpop.xlane.xlu0 %81
    %v83 = vadd.f32 %v65, %v76
    %v84 = vadd.f32 %v66, %v79
    %v85 = vadd.f32 %v67, %v82
    %vm86 = vcmask 7168
    %87 = vst.msk [vmem:[%s2] sm:$0xff] %vm86, %v83
    %88 = vst.msk [vmem:[%s2 + $0x8] sm:$0xff] %vm86, %v84
    %89 = vst.msk [vmem:[%s2 + $0x10] sm:$0xff] %vm86, %v85
    // Predicated region
    $region22: #{tpu_custom_call.1} parent=1 // pred_check
      _
    $region23: #{tpu_custom_call.1} parent=1 // pred_check_branch
      %91 = sbr.rel (0) target = $region25
    $region24: #{tpu_custom_call.1} parent=1 // pred_region
      _
    $region25: #{tpu_custom_call.1} parent=1 // pred_fallthru
      _
    // Predicated region
    $region26: #{tpu_custom_call.1} parent=1 // pred_check
      _
    $region27: #{tpu_custom_call.1} parent=1 // pred_check_branch
      %93 = sbr.rel (0) target = $region29
    $region28: #{tpu_custom_call.1} parent=1 // pred_region
      _
    $region29: #{tpu_custom_call.1} parent=1 // pred_fallthru
      _
    %94 = vsyncpa [#allocation3], 1
    %95 = vsyncpa [#allocation5], 1

</llo_original>
